<compile_context>
chip_gen: v6e
topology: v6e:2x2x1
jax: 0.10.0
libtpu: 0.0.40
codegen_flags: <defaults>
</compile_context>

<pallas_src>
import functools

import numpy as np

import jax
import jax.numpy as jnp
from jax import lax
from jax.experimental import pallas as pl
from jax.experimental.pallas import tpu as pltpu


def _conv_kernel(x_ref, w_ref, m_ref, o_ref, p_ref, *,
                 W, HWp, K, Cin, Cpad, Bb):
    """One batch block (Bb elements) per grid step.

    x_ref: (Bb, Cin, HWp)      flattened NCHW input block
    w_ref: (Cout, ROWS)        weights: column Cpad*t + ci = w[:, ci, kh, kw],
                               channel-padded to Cpad per tap; last 8 columns
                               are [bias, 0, ..., 0]
    m_ref: (K*K*Cpad, HWp)     elementwise border masks (fused zero 'same'
                               padding); rows with ci >= Cin are all zero
    o_ref: (Bb, Cout, HWp)     flattened NCHW output block
    p_ref: (ROWS, Bb*HWp)      VMEM scratch: im2col patch matrix
    """
    KK = K * K
    pad = (K - 1) // 2

    # Channel-pad each batch element's slab to Cpad (=8) sublanes once, so all
    # later rolls / multiplies / stores are full-tile.
    xs = []
    for j in range(Bb):
        xj = x_ref[j]                                            # (Cin, HWp)
        if Cpad > Cin:
            xj = jnp.concatenate(
                [xj, jnp.zeros((Cpad - Cin, HWp), xj.dtype)], axis=0)
        xs.append(xj)                                            # (Cpad, HWp)

    # im2col build: each tap is a lane roll of the input slab (XLU) masked
    # elementwise by the precomputed border mask (VPU), stored as a full
    # 8-sublane / 128-lane aligned block (lane offset j*HWp is 128-aligned).
    # Wrap-around from the circular roll lands only on masked-out positions.
    for t in range(KK):
        kh, kw = divmod(t, K)
        s = (kh - pad) * W + (kw - pad)          # flat spatial offset of tap
        shift = (-s) % HWp
        m_t = m_ref[t * Cpad:(t + 1) * Cpad, :]                  # (Cpad, HWp)
        for j in range(Bb):
            rolled = xs[j] if shift == 0 else pltpu.roll(xs[j], shift, axis=1)
            p_ref[t * Cpad:(t + 1) * Cpad,
                  j * HWp:(j + 1) * HWp] = rolled * m_t

    # Bias block: a ones row (dotted against the bias column of w) plus zero
    # pad rows.  Rewritten every step so no cross-step scratch dependence.
    r0 = KK * Cpad
    ridx = lax.broadcasted_iota(jnp.int32, (8, Bb * HWp), 0)
    p_ref[r0:r0 + 8, :] = jnp.where(ridx == 0, 1.0, 0.0).astype(p_ref.dtype)

    # One fused contraction-ROWS matmul, f32 accumulation, bias included.
    acc = jnp.dot(w_ref[...], p_ref[...], preferred_element_type=jnp.float32)

    # Lane-dense (Cout, HWp) stores, one per batch element in the block.
    for j in range(Bb):
        o_ref[j] = acc[:, j * HWp:(j + 1) * HWp].astype(o_ref.dtype)


def my_convo2d(x_nchw, weight, bias, *, kernel_size, lane_target=2048):
    """Pallas equivalent of MyConvo2d.forward (stride=1, padding=(K-1)//2).

    x_nchw : (N, Cin, H, W)    float32
    weight : (Cout, Cin, K, K) float32   (PyTorch Conv2d layout)
    bias   : (Cout,)           float32
    returns: (N, Cout, H, W)   float32
    """
    N, Cin, H, W = x_nchw.shape
    Cout = weight.shape[0]
    K = kernel_size
    if K % 2 != 1:
        # TODO(synk): even kernel_size changes the output spatial size in
        # PyTorch; only the odd-K (same-size) case is implemented here.
        raise NotImplementedError("my_convo2d only supports odd kernel_size")
    pad = (K - 1) // 2
    HW = H * W
    HWp = ((HW + 127) // 128) * 128          # lane-dense flattened spatial dim
    Cpad = ((Cin + 7) // 8) * 8              # sublane-aligned per-tap rows
    KK = K * K
    ROWS = KK * Cpad + 8                     # + bias block (ones row + pad)

    # Batch block size: widen the MXU RHS to ~lane_target lanes per step while
    # keeping >= 2 grid steps (both v7x TensorCores; no-op on 1-TC v5e/v6e).
    Bb = max(1, lane_target // HWp)
    if N >= 2:
        Bb = min(Bb, pl.cdiv(N, 2))
    Bb = max(1, min(Bb, N))
    Np = pl.cdiv(N, Bb) * Bb

    # ---- wrapper glue: reshapes (pads only if shapes require it) -----------
    x_flat = x_nchw.reshape(N, Cin, HW)
    if HWp != HW or Np != N:
        x_flat = jnp.pad(x_flat, ((0, Np - N), (0, 0), (0, HWp - HW)))

    # Weight matrix (Cout, ROWS) in (tap, channel-padded) order + bias column.
    w_taps = jnp.transpose(weight, (0, 2, 3, 1)).reshape(Cout, KK, Cin)
    w_taps = jnp.pad(w_taps, ((0, 0), (0, 0), (0, Cpad - Cin)))
    w_taps = w_taps.reshape(Cout, KK * Cpad)
    w_bias = jnp.pad(bias.reshape(Cout, 1), ((0, 0), (0, 7)))
    w_mat = jnp.concatenate([w_taps, w_bias], axis=1).astype(jnp.float32)

    # Compile-time border masks, pre-expanded to (KK*Cpad, HWp):
    # masks[Cpad*t + ci, h*W + w] = 1 iff ci < Cin and tap t=(kh,kw) reads
    # inside the image for output (h, w).  Implements zero 'same' padding and
    # also zeroes roll wrap-around, channel-pad rows and HW-pad lanes.
    hh, ww = np.meshgrid(np.arange(H), np.arange(W), indexing="ij")
    masks_np = np.zeros((KK * Cpad, HWp), dtype=np.float32)
    for kh in range(K):
        for kw in range(K):
            dh, dw = kh - pad, kw - pad
            valid = ((hh + dh >= 0) & (hh + dh < H) &
                     (ww + dw >= 0) & (ww + dw < W)).reshape(-1)
            t = kh * K + kw
            masks_np[Cpad * t:Cpad * t + Cin, :HW] = valid.astype(np.float32)
    masks = jnp.asarray(masks_np)

    kernel = functools.partial(_conv_kernel, W=W, HWp=HWp, K=K,
                               Cin=Cin, Cpad=Cpad, Bb=Bb)

    flops = 2 * N * HW * Cin * Cout * KK
    bytes_accessed = 4 * (x_flat.size + w_mat.size + masks.size
                          + Np * Cout * HWp)

    out_flat = pl.pallas_call(
        kernel,
        out_shape=jax.ShapeDtypeStruct((Np, Cout, HWp), x_nchw.dtype),
        grid_spec=pltpu.PrefetchScalarGridSpec(
            num_scalar_prefetch=0,
            grid=(Np // Bb,),
            in_specs=[
                pl.BlockSpec((Bb, Cin, HWp), lambda n: (n, 0, 0)),
                pl.BlockSpec((Cout, ROWS), lambda n: (0, 0)),
                pl.BlockSpec((KK * Cpad, HWp), lambda n: (0, 0)),
            ],
            out_specs=pl.BlockSpec((Bb, Cout, HWp), lambda n: (n, 0, 0)),
            scratch_shapes=[pltpu.VMEM((ROWS, Bb * HWp), jnp.float32)],
        ),
        compiler_params=pltpu.CompilerParams(
            dimension_semantics=("parallel",)),
        cost_estimate=pl.CostEstimate(
            flops=flops, transcendentals=0, bytes_accessed=bytes_accessed),
    )(x_flat, w_mat, masks)

    # Trim batch / lane padding (no-op slices when nothing was padded).
    return out_flat[:N, :, :HW].reshape(N, Cout, H, W)


if __name__ == "__main__":
    # Module config: MyConvo2d(input_dim=4, output_dim=8, kernel_size=3)
    N, Cin, H, W = 2, 4, 16, 16
    Cout, K = 8, 3

    key = jax.random.PRNGKey(0)
    kx, kwt, kb = jax.random.split(key, 3)
    x = jax.random.normal(kx, (N, Cin, H, W), dtype=jnp.float32)
    weight = jax.random.normal(kwt, (Cout, Cin, K, K), dtype=jnp.float32) * 0.1
    bias = jax.random.normal(kb, (Cout,), dtype=jnp.float32) * 0.1

    conv = jax.jit(functools.partial(my_convo2d, kernel_size=K))
    out = jax.block_until_ready(conv(x, weight, bias))

    # Reference check against XLA conv (same semantics as nn.Conv2d, NCHW).
    ref = lax.conv_general_dilated(
        x, weight, window_strides=(1, 1), padding="SAME",
        dimension_numbers=("NCHW", "OIHW", "NCHW"),
    ) + bias.reshape(1, Cout, 1, 1)
    assert out.shape == (N, Cout, H, W)
    assert jnp.allclose(out, ref, atol=1e-4, rtol=1e-4), "mismatch vs reference conv"

    print("KERNEL_OK")
</pallas_src>

<mosaic_0001>
module attributes {stable_mosaic.version = 11 : i64} {
  func.func @_conv_kernel(%arg0: i32, %arg1: memref<1x4x256xf32, #tpu.memory_space<vmem>>, %arg2: memref<8x80xf32, #tpu.memory_space<vmem>>, %arg3: memref<72x256xf32, #tpu.memory_space<vmem>>, %arg4: memref<1x8x256xf32, #tpu.memory_space<vmem>>, %arg5: memref<80x256xf32, #tpu.memory_space<vmem>>) attributes {dimension_semantics = [#tpu.dimension_semantics<parallel>], iteration_bounds = array<i64: 2>, scalar_prefetch = 0 : i64, scratch_operands = 1 : i64, tpu.core_type = #tpu.core_type<tc>, window_params = [{transform_indices = @transform_0, window_bounds = array<i64: 1, 4, 256>}, {pipeline_mode = #tpu.pipeline_mode<synchronous>, transform_indices = @transform_1, window_bounds = array<i64: 8, 80>}, {pipeline_mode = #tpu.pipeline_mode<synchronous>, transform_indices = @transform_2, window_bounds = array<i64: 72, 256>}, {transform_indices = @transform_3, window_bounds = array<i64: 1, 8, 256>}]} {
    %c0 = arith.constant 0 : index
    %c0_0 = arith.constant 0 : index
    %c0_1 = arith.constant 0 : index
    %0 = vector.load %arg1[%c0, %c0_0, %c0_1] : memref<1x4x256xf32, #tpu.memory_space<vmem>>, vector<1x4x256xf32>
    %1 = vector.shape_cast %0 : vector<1x4x256xf32> to vector<4x256xf32>
    %cst = arith.constant 0.000000e+00 : f32
    %2 = vector.broadcast %cst : f32 to vector<4x256xf32>
    %3 = tpu.concatenate %1, %2 in 0 : vector<4x256xf32>, vector<4x256xf32> -> vector<8x256xf32>
    %c0_2 = arith.constant 0 : index
    %c0_3 = arith.constant 0 : index
    %4 = vector.load %arg3[%c0_2, %c0_3] : memref<72x256xf32, #tpu.memory_space<vmem>>, vector<8x256xf32>
    %c17_i32 = arith.constant 17 : i32
    %5 = tpu.dynamic_rotate %3 by %c17_i32 dim 1 : vector<8x256xf32>, i32 -> vector<8x256xf32>
    %6 = arith.mulf %5, %4 : vector<8x256xf32>
    %c0_4 = arith.constant 0 : index
    %c0_5 = arith.constant 0 : index
    %7 = vector.load %arg5[%c0_4, %c0_5] : memref<80x256xf32, #tpu.memory_space<vmem>>, vector<8x256xf32>
    tpu.vector_store %arg5[%c0_4, %c0_5], %6 {strides = array<i32>} : memref<80x256xf32, #tpu.memory_space<vmem>>, vector<8x256xf32>,
    %c8 = arith.constant 8 : index
    %c0_6 = arith.constant 0 : index
    %8 = vector.load %arg3[%c8, %c0_6] : memref<72x256xf32, #tpu.memory_space<vmem>>, vector<8x256xf32>
    %c16_i32 = arith.constant 16 : i32
    %9 = tpu.dynamic_rotate %3 by %c16_i32 dim 1 : vector<8x256xf32>, i32 -> vector<8x256xf32>
    %10 = arith.mulf %9, %8 : vector<8x256xf32>
    %c8_7 = arith.constant 8 : index
    %c0_8 = arith.constant 0 : index
    %11 = vector.load %arg5[%c8_7, %c0_8] : memref<80x256xf32, #tpu.memory_space<vmem>>, vector<8x256xf32>
    tpu.vector_store %arg5[%c8_7, %c0_8], %10 {strides = array<i32>} : memref<80x256xf32, #tpu.memory_space<vmem>>, vector<8x256xf32>,
    %c16 = arith.constant 16 : index
    %c0_9 = arith.constant 0 : index
    %12 = vector.load %arg3[%c16, %c0_9] : memref<72x256xf32, #tpu.memory_space<vmem>>, vector<8x256xf32>
    %c15_i32 = arith.constant 15 : i32
    %13 = tpu.dynamic_rotate %3 by %c15_i32 dim 1 : vector<8x256xf32>, i32 -> vector<8x256xf32>
    %14 = arith.mulf %13, %12 : vector<8x256xf32>
    %c16_10 = arith.constant 16 : index
    %c0_11 = arith.constant 0 : index
    %15 = vector.load %arg5[%c16_10, %c0_11] : memref<80x256xf32, #tpu.memory_space<vmem>>, vector<8x256xf32>
    tpu.vector_store %arg5[%c16_10, %c0_11], %14 {strides = array<i32>} : memref<80x256xf32, #tpu.memory_space<vmem>>, vector<8x256xf32>,
    %c24 = arith.constant 24 : index
    %c0_12 = arith.constant 0 : index
    %16 = vector.load %arg3[%c24, %c0_12] : memref<72x256xf32, #tpu.memory_space<vmem>>, vector<8x256xf32>
    %c1_i32 = arith.constant 1 : i32
    %17 = tpu.dynamic_rotate %3 by %c1_i32 dim 1 : vector<8x256xf32>, i32 -> vector<8x256xf32>
    %18 = arith.mulf %17, %16 : vector<8x256xf32>
    %c24_13 = arith.constant 24 : index
    %c0_14 = arith.constant 0 : index
    %19 = vector.load %arg5[%c24_13, %c0_14] : memref<80x256xf32, #tpu.memory_space<vmem>>, vector<8x256xf32>
    tpu.vector_store %arg5[%c24_13, %c0_14], %18 {strides = array<i32>} : memref<80x256xf32, #tpu.memory_space<vmem>>, vector<8x256xf32>,
    %c32 = arith.constant 32 : index
    %c0_15 = arith.constant 0 : index
    %20 = vector.load %arg3[%c32, %c0_15] : memref<72x256xf32, #tpu.memory_space<vmem>>, vector<8x256xf32>
    %21 = arith.mulf %3, %20 : vector<8x256xf32>
    %c32_16 = arith.constant 32 : index
    %c0_17 = arith.constant 0 : index
    %22 = vector.load %arg5[%c32_16, %c0_17] : memref<80x256xf32, #tpu.memory_space<vmem>>, vector<8x256xf32>
    tpu.vector_store %arg5[%c32_16, %c0_17], %21 {strides = array<i32>} : memref<80x256xf32, #tpu.memory_space<vmem>>, vector<8x256xf32>,
    %c40 = arith.constant 40 : index
    %c0_18 = arith.constant 0 : index
    %23 = vector.load %arg3[%c40, %c0_18] : memref<72x256xf32, #tpu.memory_space<vmem>>, vector<8x256xf32>
    %c255_i32 = arith.constant 255 : i32
    %24 = tpu.dynamic_rotate %3 by %c255_i32 dim 1 : vector<8x256xf32>, i32 -> vector<8x256xf32>
    %25 = arith.mulf %24, %23 : vector<8x256xf32>
    %c40_19 = arith.constant 40 : index
    %c0_20 = arith.constant 0 : index
    %26 = vector.load %arg5[%c40_19, %c0_20] : memref<80x256xf32, #tpu.memory_space<vmem>>, vector<8x256xf32>
    tpu.vector_store %arg5[%c40_19, %c0_20], %25 {strides = array<i32>} : memref<80x256xf32, #tpu.memory_space<vmem>>, vector<8x256xf32>,
    %c48 = arith.constant 48 : index
    %c0_21 = arith.constant 0 : index
    %27 = vector.load %arg3[%c48, %c0_21] : memref<72x256xf32, #tpu.memory_space<vmem>>, vector<8x256xf32>
    %c241_i32 = arith.constant 241 : i32
    %28 = tpu.dynamic_rotate %3 by %c241_i32 dim 1 : vector<8x256xf32>, i32 -> vector<8x256xf32>
    %29 = arith.mulf %28, %27 : vector<8x256xf32>
    %c48_22 = arith.constant 48 : index
    %c0_23 = arith.constant 0 : index
    %30 = vector.load %arg5[%c48_22, %c0_23] : memref<80x256xf32, #tpu.memory_space<vmem>>, vector<8x256xf32>
    tpu.vector_store %arg5[%c48_22, %c0_23], %29 {strides = array<i32>} : memref<80x256xf32, #tpu.memory_space<vmem>>, vector<8x256xf32>,
    %c56 = arith.constant 56 : index
    %c0_24 = arith.constant 0 : index
    %31 = vector.load %arg3[%c56, %c0_24] : memref<72x256xf32, #tpu.memory_space<vmem>>, vector<8x256xf32>
    %c240_i32 = arith.constant 240 : i32
    %32 = tpu.dynamic_rotate %3 by %c240_i32 dim 1 : vector<8x256xf32>, i32 -> vector<8x256xf32>
    %33 = arith.mulf %32, %31 : vector<8x256xf32>
    %c56_25 = arith.constant 56 : index
    %c0_26 = arith.constant 0 : index
    %34 = vector.load %arg5[%c56_25, %c0_26] : memref<80x256xf32, #tpu.memory_space<vmem>>, vector<8x256xf32>
    tpu.vector_store %arg5[%c56_25, %c0_26], %33 {strides = array<i32>} : memref<80x256xf32, #tpu.memory_space<vmem>>, vector<8x256xf32>,
    %c64 = arith.constant 64 : index
    %c0_27 = arith.constant 0 : index
    %35 = vector.load %arg3[%c64, %c0_27] : memref<72x256xf32, #tpu.memory_space<vmem>>, vector<8x256xf32>
    %c239_i32 = arith.constant 239 : i32
    %36 = tpu.dynamic_rotate %3 by %c239_i32 dim 1 : vector<8x256xf32>, i32 -> vector<8x256xf32>
    %37 = arith.mulf %36, %35 : vector<8x256xf32>
    %c64_28 = arith.constant 64 : index
    %c0_29 = arith.constant 0 : index
    %38 = vector.load %arg5[%c64_28, %c0_29] : memref<80x256xf32, #tpu.memory_space<vmem>>, vector<8x256xf32>
    tpu.vector_store %arg5[%c64_28, %c0_29], %37 {strides = array<i32>} : memref<80x256xf32, #tpu.memory_space<vmem>>, vector<8x256xf32>,
    %39 = tpu.iota {dimensions = array<i32: 0>} : vector<8x256xi32>
    %c0_i32 = arith.constant 0 : i32
    %40 = vector.broadcast %c0_i32 : i32 to vector<8x256xi32>
    %41 = arith.cmpi eq, %39, %40 : vector<8x256xi32>
    %cst_30 = arith.constant 1.000000e+00 : f32
    %cst_31 = arith.constant 0.000000e+00 : f32
    %42 = vector.broadcast %cst_30 : f32 to vector<8x256xf32>
    %43 = vector.broadcast %cst_31 : f32 to vector<8x256xf32>
    %44 = arith.select %41, %42, %43 : vector<8x256xi1>, vector<8x256xf32>
    %c72 = arith.constant 72 : index
    %c0_32 = arith.constant 0 : index
    %45 = vector.load %arg5[%c72, %c0_32] : memref<80x256xf32, #tpu.memory_space<vmem>>, vector<8x256xf32>
    tpu.vector_store %arg5[%c72, %c0_32], %44 {strides = array<i32>} : memref<80x256xf32, #tpu.memory_space<vmem>>, vector<8x256xf32>,
    %c0_33 = arith.constant 0 : index
    %c0_34 = arith.constant 0 : index
    %46 = vector.load %arg2[%c0_33, %c0_34] : memref<8x80xf32, #tpu.memory_space<vmem>>, vector<8x80xf32>
    %c0_35 = arith.constant 0 : index
    %c0_36 = arith.constant 0 : index
    %47 = vector.load %arg5[%c0_35, %c0_36] : memref<80x256xf32, #tpu.memory_space<vmem>>, vector<80x256xf32>
    %cst_37 = arith.constant dense<0.000000e+00> : vector<8x256xf32>
    %48 = tpu.matmul %46, %47, %cst_37 {dimension_numbers = #tpu.dot_dimension_numbers<[1], [0], [0], [1], [0, 0, 1, 1], [], []>} : vector<8x80xf32>, vector<80x256xf32>, vector<8x256xf32> -> vector<8x256xf32>
    %c0_38 = arith.constant 0 : index
    %c0_39 = arith.constant 0 : index
    %c0_40 = arith.constant 0 : index
    %49 = vector.load %arg4[%c0_38, %c0_39, %c0_40] : memref<1x8x256xf32, #tpu.memory_space<vmem>>, vector<1x8x256xf32>
    %50 = vector.shape_cast %49 : vector<1x8x256xf32> to vector<8x256xf32>
    %51 = vector.shape_cast %48 : vector<8x256xf32> to vector<1x8x256xf32>
    tpu.vector_store %arg4[%c0_38, %c0_39, %c0_40], %51 {strides = array<i32>} : memref<1x8x256xf32, #tpu.memory_space<vmem>>, vector<1x8x256xf32>,
    return
  }
  func.func @transform_0(%arg0: i32) -> (i32, i32, i32) {
    %c0_i32 = arith.constant 0 : i32
    %c0_i32_0 = arith.constant 0 : i32
    %c0_i32_1 = arith.constant 0 : i32
    return %arg0, %c0_i32, %c0_i32_0 : i32, i32, i32
  }
  func.func @transform_1(%arg0: i32) -> (i32, i32) {
    %c0_i32 = arith.constant 0 : i32
    %c0_i32_0 = arith.constant 0 : i32
    %c0_i32_1 = arith.constant 0 : i32
    return %c0_i32, %c0_i32_0 : i32, i32
  }
  func.func @transform_2(%arg0: i32) -> (i32, i32) {
    %c0_i32 = arith.constant 0 : i32
    %c0_i32_0 = arith.constant 0 : i32
    %c0_i32_1 = arith.constant 0 : i32
    return %c0_i32, %c0_i32_0 : i32, i32
  }
  func.func @transform_3(%arg0: i32) -> (i32, i32, i32) {
    %c0_i32 = arith.constant 0 : i32
    %c0_i32_0 = arith.constant 0 : i32
    %c0_i32_1 = arith.constant 0 : i32
    return %arg0, %c0_i32, %c0_i32_0 : i32, i32, i32
  }
}

</mosaic_0001>

<llo_original>
// kernel: my_convo2d.1
$region0: #{my_convo2d.1}
  #allocation0 [shape = 'u32[]', space=smem, size = 0x4, offset = 0x4, fixed_abs, tag = 'smem constant byte address 0x4 - core index']
  #allocation1 [shape = 'u32[144,128]{1,0:T(1,128)}', space=vmem, size = 0x12000, scoped, tag = 'internal scratch']
  #allocation2 [shape = 'f32[80,256]{1,0:T(8,128)}', space=vmem, size = 0x14000, scoped, tag = 'scratch operand']
  %s0 = inlined_call_operand.vmem [shape: f32[2,4,256], index: 0, kind: input, shape index: {}]
  %s1 = inlined_call_operand.vmem [shape: f32[8,80], index: 1, kind: input, shape index: {}]
  %s2 = inlined_call_operand.vmem [shape: f32[72,256], index: 2, kind: input, shape index: {}]
  %s3 = inlined_call_operand.vmem [shape: f32[2,8,256], index: 3, kind: output, shape index: {}]
  %s4 = sld [smem:[#allocation0]]
  $region45: #{my_convo2d.1} parent=0
    _
  %s6 = ssub.s32 1, %s4
  %s7 = scalar_select 0, %s6, %s4
  loop: start=0, step=1, limit=4
  $region2: #{my_convo2d.1} parent=0 // loop_pre_header
    _
  $region3: #{my_convo2d.1} parent=0 // loop_header
    %s9 = sphi 0, %s13
    %p10 = scmp.ge.s32.totalorder %s9, 4
    %s19 = sphi 0, %s21
    %s22 = sphi 0, %s19
    %s23 = sphi 0, %s22
    %s39 = sphi 0, %s23
    %s43 = sphi 0, %s43
    %s45 = sphi 0, %s43
    %s46 = sphi 0, %s45
    %s60 = sphi 0, %s46
    %s64 = sphi 0, %s64
    %s66 = sphi 0, %s64
    %s67 = sphi 0, %s66
    %s81 = sphi 0, %s67
    %s87 = sphi 0, %s89
    %s90 = sphi 0, %s87
    %s91 = sphi 0, %s90
    %s107 = sphi 0, %s91
  $region4: #{my_convo2d.1} parent=0 // loop_header_branch
    %12 = sbr.rel (%p10) target = $region8
  $region5: #{my_convo2d.1} parent=0 // loop_body
    %s14 = ssub.s32 %s9, 1
    %s15 = ssub.s32 %s9, 2
    %s16 = sadd.s32 %s9, 1
    %s17 = ssub.s32 %s9, %s16
    %p18 = scmp.eq.s32.totalorder %s17, 0
    %s20 = sadd.s32 %s19, 1
    %s21 = scalar_select %p18, %s19, %s20
    %p24 = pneg %p18
    %p25 = scmp.eq.s32.totalorder %s9, 1
    %p26 = por %p24, %p25
    %p27 = scmp.ne.s32.totalorder %s19, %s22
    %p28 = scmp.eq.s32.totalorder %s9, 0
    %p29 = por %p27, %p28
    %p30 = scmp.ne.s32.totalorder %s19, %s22
    %p31 = scmp.eq.s32.totalorder %s14, 1
    %p32 = por %p30, %p31
    %p33 = scmp.ne.s32.totalorder %s22, %s23
    %p34 = scmp.eq.s32.totalorder %s14, 0
    %p35 = por %p33, %p34
    %p36 = scmp.ne.s32.totalorder %s22, %s23
    %p37 = scmp.eq.s32.totalorder %s15, 1
    %p38 = por %p36, %p37
    %p40 = scmp.ne.s32.totalorder %s23, %s39
    %p41 = scmp.eq.s32.totalorder %s15, 0
    %p42 = por %p40, %p41
    %s44 = sadd.s32 %s43, 1
    %p47 = scmp.eq.s32.totalorder %s9, 1
    %p48 = scmp.ne.s32.totalorder %s43, %s45
    %p49 = scmp.eq.s32.totalorder %s9, 0
    %p50 = por %p48, %p49
    %p51 = scmp.ne.s32.totalorder %s43, %s45
    %p52 = scmp.eq.s32.totalorder %s14, 1
    %p53 = por %p51, %p52
    %p54 = scmp.ne.s32.totalorder %s45, %s46
    %p55 = scmp.eq.s32.totalorder %s14, 0
    %p56 = por %p54, %p55
    %p57 = scmp.ne.s32.totalorder %s45, %s46
    %p58 = scmp.eq.s32.totalorder %s15, 1
    %p59 = por %p57, %p58
    %p61 = scmp.ne.s32.totalorder %s46, %s60
    %p62 = scmp.eq.s32.totalorder %s15, 0
    %p63 = por %p61, %p62
    %s65 = sadd.s32 %s64, 1
    %p68 = scmp.eq.s32.totalorder %s9, 1
    %p69 = scmp.ne.s32.totalorder %s64, %s66
    %p70 = scmp.eq.s32.totalorder %s9, 0
    %p71 = por %p69, %p70
    %p72 = scmp.ne.s32.totalorder %s64, %s66
    %p73 = scmp.eq.s32.totalorder %s14, 1
    %p74 = por %p72, %p73
    %p75 = scmp.ne.s32.totalorder %s66, %s67
    %p76 = scmp.eq.s32.totalorder %s14, 0
    %p77 = por %p75, %p76
    %p78 = scmp.ne.s32.totalorder %s66, %s67
    %p79 = scmp.eq.s32.totalorder %s15, 1
    %p80 = por %p78, %p79
    %p82 = scmp.ne.s32.totalorder %s67, %s81
    %p83 = scmp.eq.s32.totalorder %s15, 0
    %p84 = por %p82, %p83
    %s85 = ssub.s32 %s9, %s16
    %p86 = scmp.eq.s32.totalorder %s85, 0
    %s88 = sadd.s32 %s87, 1
    %s89 = scalar_select %p86, %s87, %s88
    %p92 = pneg %p86
    %p93 = scmp.eq.s32.totalorder %s9, 1
    %p94 = por %p92, %p93
    %p95 = scmp.ne.s32.totalorder %s87, %s90
    %p96 = scmp.eq.s32.totalorder %s9, 0
    %p97 = por %p95, %p96
    %p98 = scmp.ne.s32.totalorder %s87, %s90
    %p99 = scmp.eq.s32.totalorder %s14, 1
    %p100 = por %p98, %p99
    %p101 = scmp.ne.s32.totalorder %s90, %s91
    %p102 = scmp.eq.s32.totalorder %s14, 0
    %p103 = por %p101, %p102
    %p104 = scmp.ne.s32.totalorder %s90, %s91
    %p105 = scmp.eq.s32.totalorder %s15, 1
    %p106 = por %p104, %p105
    %p108 = scmp.ne.s32.totalorder %s91, %s107
    %p109 = scmp.eq.s32.totalorder %s15, 0
    %p110 = por %p108, %p109
    %p111 = scmp.le.s32.totalorder 1, %s9
    %p112 = scmp.lt.s32.totalorder %s9, 3
    %p113 = pnand %p111, %p112
    %p114 = pneg %p113
    // Predicated region
    $region9: #{my_convo2d.1} parent=5 // pred_check
      _
    $region10: #{my_convo2d.1} parent=5 // pred_check_branch
      %116 = sbr.rel (%p113) target = $region12
    $region11: #{my_convo2d.1} parent=5 // pred_region
      %s117 = ssub.s32 %s9, 1
      // Predicated region
      $region13: #{my_convo2d.1} parent=11 // pred_check
        %p118 = pneg %p56
      $region14: #{my_convo2d.1} parent=11 // pred_check_branch
        %120 = sbr.rel (%p118) target = $region16
      $region15: #{my_convo2d.1} parent=11 // pred_region
        _
      $region16: #{my_convo2d.1} parent=11 // pred_fallthru
        _
      // Predicated region
      $region17: #{my_convo2d.1} parent=11 // pred_check
        %p121 = pneg %p77
      $region18: #{my_convo2d.1} parent=11 // pred_check_branch
        %123 = sbr.rel (%p121) target = $region20
      $region19: #{my_convo2d.1} parent=11 // pred_region
        _
      $region20: #{my_convo2d.1} parent=11 // pred_fallthru
        _
    $region12: #{my_convo2d.1} parent=5 // pred_fallthru
      _
    %p124 = scmp.lt.s32.totalorder %s9, 2
    // Predicated region
    $region21: #{my_convo2d.1} parent=5 // pred_check
      %p125 = pneg %p124
    $region22: #{my_convo2d.1} parent=5 // pred_check_branch
      %127 = sbr.rel (%p125) target = $region24
    $region23: #{my_convo2d.1} parent=5 // pred_region
      // Predicated region
      $region25: #{my_convo2d.1} parent=23 // pred_check
        %p128 = pneg %p29
      $region26: #{my_convo2d.1} parent=23 // pred_check_branch
        %130 = sbr.rel (%p128) target = $region28
      $region27: #{my_convo2d.1} parent=23 // pred_region
        %p131 = scmp.lt.s32.totalorder %s9, 1
        %s132 = scalar_select %p131, %s9, 1
        %s133 = smul.addr %s132, 2
        %s134 = smul.addr %s133, 4
        %s135 = scalar_lea.vmem %s0, %s134
      $region28: #{my_convo2d.1} parent=23 // pred_fallthru
        _
    $region24: #{my_convo2d.1} parent=5 // pred_fallthru
      _
    %p136 = scmp.le.s32.totalorder 1, %s9
    %p137 = scmp.lt.s32.totalorder %s9, 3
    %p138 = pnand %p136, %p137
    %p139 = pneg %p138
    // Predicated region
    $region29: #{my_convo2d.1} parent=5 // pred_check
      _
    $region30: #{my_convo2d.1} parent=5 // pred_check_branch
      %141 = sbr.rel (%p138) target = $region32
    $region31: #{my_convo2d.1} parent=5 // pred_region
      %s142 = ssub.s32 %s9, 1
      %p143 = scmp.lt.s32.totalorder %s14, 1
      %s144 = scalar_select %p143, %s14, 1
      %s145 = smul.addr %s144, 2
      %s146 = smul.addr %s145, 4
      %s147 = scalar_lea.vmem %s0, %s146
      %p148 = pneg %p35
      %p149 = pneg %p32
      %p150 = pneg %p56
      %p151 = pneg %p53
      %p152 = pneg %p77
      %p153 = pneg %p74
      %p154 = pneg %p103
      %p155 = pneg %p100
      %p156 = scmp.lt.s32.totalorder %s14, 1
      %s157 = scalar_select %p156, %s14, 1
      %s158 = smul.addr %s157, 2
      %s159 = smul.addr %s158, 8
      %s160 = scalar_lea.vmem %s3, %s159
      %p161 = scmp.lt.s32.totalorder %s14, 1
      %s162 = scalar_select %p161, %s14, 1
      %s163 = smul.addr %s162, 2
      %s164 = smul.addr %s163, 4
      %s165 = scalar_lea.vmem %s0, %s164
      %p166 = scmp.lt.s32.totalorder %s14, 1
      %s167 = scalar_select %p166, %s14, 1
      %s168 = smul.addr %s167, 2
      %s169 = smul.addr %s168, 8
      %s170 = scalar_lea.vmem %s3, %s169
      %v171 = vld [vmem:[%s165] sm:$0xff]
      %v173 = vcombine.high %v171, %v171
      %vm175 = vcmask 1043456
      %v176 = vsel %vm175, %v171, 0.0
      %v177 = vsel %vm175, %v173, 0.0
      %v178 = vld [vmem:[%s2] sm:$0xff]
      %v179 = vld [vmem:[%s2 + $0x8] sm:$0xff]
      %180 = vrot.lane.b32.xlu0 %v176, 17
      %v181 = vpop.permute.xlu0 %180
      %182 = vrot.lane.b32.xlu0 %v177, 17
      %v183 = vpop.permute.xlu0 %182
      %v184 = vlaneseq
      %v185 = vand.u32 %v184, 127
      %vm186 = vcmp.lt.s32.totalorder %v185, 17
      %v187 = vsel %vm186, %v181, %v183
      %v188 = vsel %vm186, %v183, %v181
      %v189 = vmul.f32 %v188, %v178
      %v190 = vmul.f32 %v187, %v179
      %191 = vst [vmem:[#allocation2] sm:$0xff] %v189
      %192 = vst [vmem:[#allocation2 + $0x8] sm:$0xff] %v190
      %v193 = vld [vmem:[%s2 + $0x10] sm:$0xff]
      %v194 = vld [vmem:[%s2 + $0x18] sm:$0xff]
      %195 = vrot.lane.b32.xlu0 %v176, 16
      %v196 = vpop.permute.xlu0 %195
      %197 = vrot.lane.b32.xlu0 %v177, 16
      %v198 = vpop.permute.xlu0 %197
      %vm199 = vcmp.lt.s32.totalorder %v185, 16
      %v200 = vsel %vm199, %v196, %v198
      %v201 = vsel %vm199, %v198, %v196
      %v202 = vmul.f32 %v201, %v193
      %v203 = vmul.f32 %v200, %v194
      %204 = vst [vmem:[#allocation2 + $0x10] sm:$0xff] %v202
      %205 = vst [vmem:[#allocation2 + $0x18] sm:$0xff] %v203
      %v206 = vld [vmem:[%s2 + $0x20] sm:$0xff]
      %v207 = vld [vmem:[%s2 + $0x28] sm:$0xff]
      %208 = vrot.lane.b32.xlu0 %v176, 15
      %v209 = vpop.permute.xlu0 %208
      %210 = vrot.lane.b32.xlu0 %v177, 15
      %v211 = vpop.permute.xlu0 %210
      %vm212 = vcmp.lt.s32.totalorder %v185, 15
      %v213 = vsel %vm212, %v209, %v211
      %v214 = vsel %vm212, %v211, %v209
      %v215 = vmul.f32 %v214, %v206
      %v216 = vmul.f32 %v213, %v207
      %217 = vst [vmem:[#allocation2 + $0x20] sm:$0xff] %v215
      %218 = vst [vmem:[#allocation2 + $0x28] sm:$0xff] %v216
      %v219 = vld [vmem:[%s2 + $0x30] sm:$0xff]
      %v220 = vld [vmem:[%s2 + $0x38] sm:$0xff]
      %221 = vrot.lane.b32.xlu0 %v176, 1
      %v222 = vpop.permute.xlu0 %221
      %223 = vrot.lane.b32.xlu0 %v177, 1
      %v224 = vpop.permute.xlu0 %223
      %vm225 = vcmp.lt.s32.totalorder %v185, 1
      %v226 = vsel %vm225, %v222, %v224
      %v227 = vsel %vm225, %v224, %v222
      %v228 = vmul.f32 %v227, %v219
      %v229 = vmul.f32 %v226, %v220
      %230 = vst [vmem:[#allocation2 + $0x30] sm:$0xff] %v228
      %231 = vst [vmem:[#allocation2 + $0x38] sm:$0xff] %v229
      %v232 = vld [vmem:[%s2 + $0x40] sm:$0xff]
      %v233 = vld [vmem:[%s2 + $0x48] sm:$0xff]
      %v234 = vmul.f32 %v176, %v232
      %v235 = vmul.f32 %v177, %v233
      %236 = vst [vmem:[#allocation2 + $0x40] sm:$0xff] %v234
      %237 = vst [vmem:[#allocation2 + $0x48] sm:$0xff] %v235
      %v238 = vld [vmem:[%s2 + $0x50] sm:$0xff]
      %v239 = vld [vmem:[%s2 + $0x58] sm:$0xff]
      %240 = vrot.lane.b32.xlu0 %v176, 127
      %v241 = vpop.permute.xlu0 %240
      %242 = vrot.lane.b32.xlu0 %v177, 127
      %v243 = vpop.permute.xlu0 %242
      %vm244 = vcmp.lt.s32.totalorder %v185, 127
      %v245 = vsel %vm244, %v241, %v243
      %v246 = vsel %vm244, %v243, %v241
      %v247 = vmul.f32 %v245, %v238
      %v248 = vmul.f32 %v246, %v239
      %249 = vst [vmem:[#allocation2 + $0x50] sm:$0xff] %v247
      %250 = vst [vmem:[#allocation2 + $0x58] sm:$0xff] %v248
      %v251 = vld [vmem:[%s2 + $0x60] sm:$0xff]
      %v252 = vld [vmem:[%s2 + $0x68] sm:$0xff]
      %253 = vrot.lane.b32.xlu0 %v176, 113
      %v254 = vpop.permute.xlu0 %253
      %255 = vrot.lane.b32.xlu0 %v177, 113
      %v256 = vpop.permute.xlu0 %255
      %vm257 = vcmp.lt.s32.totalorder %v185, 113
      %v258 = vsel %vm257, %v254, %v256
      %v259 = vsel %vm257, %v256, %v254
      %v260 = vmul.f32 %v258, %v251
      %v261 = vmul.f32 %v259, %v252
      %262 = vst [vmem:[#allocation2 + $0x60] sm:$0xff] %v260
      %263 = vst [vmem:[#allocation2 + $0x68] sm:$0xff] %v261
      %v264 = vld [vmem:[%s2 + $0x70] sm:$0xff]
      %v265 = vld [vmem:[%s2 + $0x78] sm:$0xff]
      %266 = vrot.lane.b32.xlu0 %v176, 112
      %v267 = vpop.permute.xlu0 %266
      %268 = vrot.lane.b32.xlu0 %v177, 112
      %v269 = vpop.permute.xlu0 %268
      %vm270 = vcmp.lt.s32.totalorder %v185, 112
      %v271 = vsel %vm270, %v267, %v269
      %v272 = vsel %vm270, %v269, %v267
      %v273 = vmul.f32 %v271, %v264
      %v274 = vmul.f32 %v272, %v265
      %275 = vst [vmem:[#allocation2 + $0x70] sm:$0xff] %v273
      %276 = vst [vmem:[#allocation2 + $0x78] sm:$0xff] %v274
      %v277 = vld [vmem:[%s2 + $0x80] sm:$0xff]
      %v278 = vld [vmem:[%s2 + $0x88] sm:$0xff]
      %279 = vrot.lane.b32.xlu0 %v176, 111
      %v280 = vpop.permute.xlu0 %279
      %281 = vrot.lane.b32.xlu0 %v177, 111
      %v282 = vpop.permute.xlu0 %281
      %vm283 = vcmp.lt.s32.totalorder %v185, 111
      %v284 = vsel %vm283, %v280, %v282
      %v285 = vsel %vm283, %v282, %v280
      %v286 = vmul.f32 %v284, %v277
      %v287 = vmul.f32 %v285, %v278
      %288 = vst [vmem:[#allocation2 + $0x80] sm:$0xff] %v286
      %289 = vst [vmem:[#allocation2 + $0x88] sm:$0xff] %v287
      %v290 = vlaneseq
      %v291 = vshrl.u32 %v290, 7
      %vm292 = vcmp.eq.s32.totalorder %v291, 0
      %v293 = vsel %vm292, 1.0, 0.0
      %294 = vst [vmem:[#allocation2 + $0x90] sm:$0xff] %v293
      %295 = vst [vmem:[#allocation2 + $0x98] sm:$0xff] %v293
      %v296 = vld [vmem:[%s1] sm:$0xff]
      %v297 = vld [vmem:[#allocation2] sm:$0xff]
      %v298 = vld [vmem:[#allocation2 + $0x8] sm:$0xff]
      %v299 = vld [vmem:[#allocation2 + $0x10] sm:$0xff]
      %v300 = vld [vmem:[#allocation2 + $0x18] sm:$0xff]
      %v301 = vld [vmem:[#allocation2 + $0x20] sm:$0xff]
      %v302 = vld [vmem:[#allocation2 + $0x28] sm:$0xff]
      %v303 = vld [vmem:[#allocation2 + $0x30] sm:$0xff]
      %v304 = vld [vmem:[#allocation2 + $0x38] sm:$0xff]
      %v305 = vld [vmem:[#allocation2 + $0x40] sm:$0xff]
      %v306 = vld [vmem:[#allocation2 + $0x48] sm:$0xff]
      %v307 = vld [vmem:[#allocation2 + $0x50] sm:$0xff]
      %v308 = vld [vmem:[#allocation2 + $0x58] sm:$0xff]
      %v309 = vld [vmem:[#allocation2 + $0x60] sm:$0xff]
      %v310 = vld [vmem:[#allocation2 + $0x68] sm:$0xff]
      %v311 = vld [vmem:[#allocation2 + $0x70] sm:$0xff]
      %v312 = vld [vmem:[#allocation2 + $0x78] sm:$0xff]
      %v313 = vld [vmem:[#allocation2 + $0x80] sm:$0xff]
      %v314 = vld [vmem:[#allocation2 + $0x88] sm:$0xff]
      %v315 = vld [vmem:[#allocation2 + $0x90] sm:$0xff]
      %v316 = vld [vmem:[#allocation2 + $0x98] sm:$0xff]
      %vm317 = vcmask 654336
      %v319 = vsel %vm317, %v296, 0
      %321 = vmatprep.subr.mxu0 0.0
      %322 = vmatpush1.msra.mxu0 0.0
      %323 = vmatprep.subr.mxu0 0.0
      %324 = vmatpush1.msra.mxu0 0.0
      %325 = vmatprep.subr.mxu0 0.0
      %326 = vmatpush1.msra.mxu0 0.0
      %327 = vmatprep.subr.mxu0 0.0
      %328 = vmatpush1.msra.mxu0 0.0
      %329 = vmatprep.subr.mxu0 0.0
      %330 = vmatpush1.msra.mxu0 0.0
      %331 = vmatprep.subr.mxu0 0.0
      %332 = vmatpush1.msra.mxu0 0.0
      %333 = vmatprep.subr.mxu0 %v316
      %334 = vmatpush1.msra.mxu0 %v315
      %335 = vmatprep.subr.mxu0 %v314
      %336 = vmatpush1.msra.mxu0 %v313
      %337 = vmatprep.subr.mxu0 %v312
      %338 = vmatpush1.msra.mxu0 %v311
      %339 = vmatprep.subr.mxu0 %v310
      %340 = vmatpush1.msra.mxu0 %v309
      %341 = vmatprep.subr.mxu0 %v308
      %342 = vmatpush1.msra.mxu0 %v307
      %343 = vmatprep.subr.mxu0 %v306
      %344 = vmatpush1.msra.mxu0 %v305
      %345 = vmatprep.subr.mxu0 %v304
      %346 = vmatpush1.msra.mxu0 %v303
      %347 = vmatprep.subr.mxu0 %v302
      %348 = vmatpush1.msra.mxu0 %v301
      %349 = vmatprep.subr.mxu0 %v300
      %350 = vmatpush1.msra.mxu0 %v299
      %351 = vmatprep.subr.mxu0 %v298
      %352 = vmatpush1.msra.mxu0 %v297
      %353 = vmatprep.subr.mxu0 0.0
      %354 = vmatpush2.msra.mxu0 0.0
      %355 = vmatprep.subr.mxu0 0.0
      %356 = vmatpush2.msra.mxu0 0.0
      %357 = vmatprep.subr.mxu0 0.0
      %358 = vmatpush2.msra.mxu0 0.0
      %359 = vmatprep.subr.mxu0 0.0
      %360 = vmatpush2.msra.mxu0 0.0
      %361 = vmatprep.subr.mxu0 0.0
      %362 = vmatpush2.msra.mxu0 0.0
      %363 = vmatprep.subr.mxu0 0.0
      %364 = vmatpush2.msra.mxu0 0.0
      %365 = vmatprep.subr.mxu0 0.0
      %366 = vmatpush2.msra.mxu0 0.0
      %367 = vmatprep.subr.mxu0 0.0
      %368 = vmatpush2.msra.mxu0 0.0
      %369 = vmatprep.subr.mxu0 0.0
      %370 = vmatpush2.msra.mxu0 0.0
      %371 = vmatprep.subr.mxu0 0.0
      %372 = vmatpush2.msra.mxu0 0.0
      %373 = vmatprep.subr.mxu0 0.0
      %374 = vmatpush2.msra.mxu0 0.0
      %375 = vmatprep.subr.mxu0 0.0
      %376 = vmatpush2.msra.mxu0 0.0
      %377 = vmatprep.subr.mxu0 0.0
      %378 = vmatpush2.msra.mxu0 0.0
      %379 = vmatprep.subr.mxu0 0.0
      %380 = vmatpush2.msra.mxu0 0.0
      %381 = vmatprep.subr.mxu0 0.0
      %382 = vmatpush2.msra.mxu0 0.0
      %383 = vmatprep.subr.mxu0 0.0
      %384 = vmatpush2.msra.mxu0 0.0
      %385 = vmatprep.mubr.f32.mxu0 0.0
      %386 = vmatmul.mubr.f32.gmra.mxu0 %v319
      %v387 = vpop.f32.mrf.mxu0
      %v388 = vadd.f32 0.0, %v387
      %v389 = vpop.f32.mrf.mxu0
      %v390 = vadd.f32 0.0, %v389
      %391 = vdwg.mxu0
      %392 = vst [vmem:[%s170] sm:$0xff] %v388
      %393 = vst [vmem:[%s170 + $0x8] sm:$0xff] %v390
      %p394 = scmp.lt.s32.totalorder %s14, 1
      %s395 = scalar_select %p394, %s14, 1
      %s396 = smul.addr %s395, 2
      %s397 = smul.addr %s396, 8
      %s398 = scalar_lea.vmem %s3, %s397
      // Predicated region
      $region33: #{my_convo2d.1} parent=31 // pred_check
        %p399 = pneg %p100
      $region34: #{my_convo2d.1} parent=31 // pred_check_branch
        %401 = sbr.rel (%p399) target = $region36
      $region35: #{my_convo2d.1} parent=31 // pred_region
        _
      $region36: #{my_convo2d.1} parent=31 // pred_fallthru
        _
    $region32: #{my_convo2d.1} parent=5 // pred_fallthru
      _
    %p402 = scmp.le.s32.totalorder 2, %s9
    // Predicated region
    $region37: #{my_convo2d.1} parent=5 // pred_check
      %p403 = pneg %p402
    $region38: #{my_convo2d.1} parent=5 // pred_check_branch
      %405 = sbr.rel (%p403) target = $region40
    $region39: #{my_convo2d.1} parent=5 // pred_region
      %s406 = ssub.s32 %s9, 2
      // Predicated region
      $region41: #{my_convo2d.1} parent=39 // pred_check
        %p407 = pneg %p106
      $region42: #{my_convo2d.1} parent=39 // pred_check_branch
        %409 = sbr.rel (%p407) target = $region44
      $region43: #{my_convo2d.1} parent=39 // pred_region
        %p410 = scmp.lt.s32.totalorder %s15, 1
        %s411 = scalar_select %p410, %s15, 1
        %s412 = smul.addr %s411, 2
        %s413 = smul.addr %s412, 8
        %s414 = scalar_lea.vmem %s3, %s413
      $region44: #{my_convo2d.1} parent=39 // pred_fallthru
        _
    $region40: #{my_convo2d.1} parent=5 // pred_fallthru
      _
  $region6: #{my_convo2d.1} parent=0 // loop_footer
    %s13 = sadd.s32 1, %s9
  $region7: #{my_convo2d.1} parent=0 // loop_footer_branch
    %8 = sbr.rel target = $region3
  $region8: #{my_convo2d.1} parent=0 // loop_exit
    _

</llo_original>
